<compile_context>
chip_gen: v5e
topology: v5e:2x2
jax: 0.10.0
libtpu: 0.0.40
codegen_flags: <defaults>
</compile_context>

<pallas_src>
import jax
import jax.numpy as jnp
from jax import lax
from jax.experimental import pallas as pl
from jax.experimental.pallas import tpu as pltpu

NEG_INF = -1e30  # finite mask value: avoids NaN if a key row is fully masked


# ----------------------------------------------------------------------------- #
# Kernel 1: fused projection + additive self-attention + input->hidden GRU gates
#   grid = (batch, query-chunk)
#   Output per (b, q): gi[b, qCQ:(q+1)CQ, :] = [vec, p_chunk] @ Wih_all^T + bih_all  (CQ, 6H)
# ----------------------------------------------------------------------------- #
def _attn_gi_kernel(pq_ref, pk_ref, w0t_ref, ws_ref, mask_ref,
                    wv_ref, wp_ref, bih_ref, gi_ref):
    p_q = pq_ref[0]                                               # (CQ, I) query rows
    p_k = pk_ref[0]                                               # (L,  I) keys == values
    w0t = w0t_ref[...]                                            # (I, H) pre-transposed

    # fused projection on the MXU (attention elementwise path leaves MXU slack)
    vq = jnp.dot(p_q, w0t, preferred_element_type=jnp.float32)    # (CQ, H)
    vk = jnp.dot(p_k, w0t, preferred_element_type=jnp.float32)    # (L,  H)

    # additive scores: w_s . tanh(v_p[c] + v_p[t])   (EUP tanh dominates)
    t = jnp.tanh(vq[:, None, :] + vk[None, :, :])                 # (CQ, L, H)
    s = jnp.sum(t * ws_ref[...][None], axis=-1)                   # (CQ, L)

    # masked softmax over key axis (finite mask value, EUP reciprocal, no divide)
    masked = mask_ref[0] > 0.0                                    # (1, L)
    s = jnp.where(masked, NEG_INF, s)
    m = jnp.max(s, axis=-1, keepdims=True)
    e = jnp.exp(s - m)
    denom = jnp.sum(e, axis=-1, keepdims=True)
    p_att = e * pl.reciprocal(denom, approx=True)                 # (CQ, L)

    # attention-weighted values (MXU)
    vec = jnp.dot(p_att, p_k, preferred_element_type=jnp.float32)  # (CQ, I)

    # fused input->hidden GRU gates for BOTH directions:
    #   gi = [vec, p] @ Wih^T + bih  ==  vec @ Wv + p @ Wp + bih      -> (CQ, 6H)
    gi = (jnp.dot(vec, wv_ref[...], preferred_element_type=jnp.float32)
          + jnp.dot(p_q, wp_ref[...], preferred_element_type=jnp.float32)
          + bih_ref[...])
    gi_ref[0] = gi.astype(gi_ref.dtype)


def attention_gi(p_bli, w0t, ws_row, mask_b1l, w_vec, w_p, bih_all, chunk_q):
    B, L, I = p_bli.shape
    H = w0t.shape[1]
    G = w_vec.shape[1]                 # 6H (3 gates x 2 directions)
    assert L % chunk_q == 0 and (chunk_q == L or chunk_q % 8 == 0)
    nq = L // chunk_q
    return pl.pallas_call(
        _attn_gi_kernel,
        out_shape=jax.ShapeDtypeStruct((B, L, G), jnp.float32),
        grid_spec=pltpu.PrefetchScalarGridSpec(
            num_scalar_prefetch=0,
            grid=(B, nq),
            in_specs=[
                pl.BlockSpec((1, chunk_q, I), lambda b, q: (b, q, 0)),  # query rows of p
                pl.BlockSpec((1, L, I),       lambda b, q: (b, 0, 0)),  # all rows of p
                pl.BlockSpec((I, H),          lambda b, q: (0, 0)),     # W0^T
                pl.BlockSpec((1, H),          lambda b, q: (0, 0)),     # w_s
                pl.BlockSpec((1, 1, L),       lambda b, q: (b, 0, 0)),  # key mask
                pl.BlockSpec((I, G),          lambda b, q: (0, 0)),     # Wih[:, :I]^T  (both dirs)
                pl.BlockSpec((I, G),          lambda b, q: (0, 0)),     # Wih[:, I:]^T  (both dirs)
                pl.BlockSpec((1, G),          lambda b, q: (0, 0)),     # bih (both dirs)
            ],
            out_specs=pl.BlockSpec((1, chunk_q, G), lambda b, q: (b, q, 0)),
        ),
        compiler_params=pltpu.CompilerParams(
            dimension_semantics=("parallel", "parallel")),
    )(p_bli, p_bli, w0t, ws_row, mask_b1l, w_vec, w_p, bih_all)


# ----------------------------------------------------------------------------- #
# Kernel 2: fused bidirectional GRU recurrence.
#   Single grid step; whole sequence resident in VMEM; unrolled time loop does the
#   forward step at t and the backward step at L-1-t each iteration.
#   gi (precomputed input gates) already contains Wih @ x + bih for both directions.
#   PyTorch gate order in the packed weights: [r, z, n].
# ----------------------------------------------------------------------------- #
def _bigru_kernel(gi_ref, whh_f_ref, whh_b_ref, bhh_f_ref, bhh_b_ref,
                  of_ref, ob_ref):
    L, B, G = gi_ref.shape
    H = of_ref.shape[-1]
    whh_f = whh_f_ref[...]          # (H, 3H) pre-transposed
    whh_b = whh_b_ref[...]
    bhh_f = bhh_f_ref[...]          # (1, 3H)
    bhh_b = bhh_b_ref[...]

    def gru_cell(gi, h, whh, bhh):
        gh = jnp.dot(h, whh, preferred_element_type=jnp.float32) + bhh
        r = jax.nn.sigmoid(gi[:, :H] + gh[:, :H])
        z = jax.nn.sigmoid(gi[:, H:2 * H] + gh[:, H:2 * H])
        n = jnp.tanh(gi[:, 2 * H:] + r * gh[:, 2 * H:])
        return (1.0 - z) * n + z * h

    def step(t, carry):
        h_f, h_b = carry
        # forward direction at time t
        gi_t = gi_ref[t]                                   # (B, 6H)
        h_f = gru_cell(gi_t[:, :3 * H], h_f, whh_f, bhh_f)
        of_ref[t] = h_f.astype(of_ref.dtype)
        # backward direction at time L-1-t
        tb = L - 1 - t
        gi_tb = gi_ref[tb]
        h_b = gru_cell(gi_tb[:, 3 * H:], h_b, whh_b, bhh_b)
        ob_ref[tb] = h_b.astype(ob_ref.dtype)
        return (h_f, h_b)

    h0 = jnp.zeros((B, H), jnp.float32)
    lax.fori_loop(0, L, step, (h0, h0), unroll=True)


def bigru(gi_lb, whh_f_t, whh_b_t, bhh_f, bhh_b):
    L, B, G = gi_lb.shape
    H = whh_f_t.shape[0]
    return pl.pallas_call(
        _bigru_kernel,
        out_shape=(jax.ShapeDtypeStruct((L, B, H), jnp.float32),
                   jax.ShapeDtypeStruct((L, B, H), jnp.float32)),
        grid_spec=pltpu.PrefetchScalarGridSpec(
            num_scalar_prefetch=0,
            grid=(1,),
            in_specs=[
                pl.BlockSpec((L, B, G),   lambda i: (0, 0, 0)),
                pl.BlockSpec((H, 3 * H),  lambda i: (0, 0)),
                pl.BlockSpec((H, 3 * H),  lambda i: (0, 0)),
                pl.BlockSpec((1, 3 * H),  lambda i: (0, 0)),
                pl.BlockSpec((1, 3 * H),  lambda i: (0, 0)),
            ],
            out_specs=(pl.BlockSpec((L, B, H), lambda i: (0, 0, 0)),
                       pl.BlockSpec((L, B, H), lambda i: (0, 0, 0))),
        ),
        compiler_params=pltpu.CompilerParams(dimension_semantics=("arbitrary",)),
    )(gi_lb, whh_f_t, whh_b_t, bhh_f, bhh_b)


# ----------------------------------------------------------------------------- #
# Full forward
# ----------------------------------------------------------------------------- #
def self_match_encoder_forward(params, p_input, p_mask, chunk_q=None):
    # p_input: (L, B, I) float32 ; p_mask: (L, B) bool (True = padding)
    L, B, I = p_input.shape
    H = params["w0"].shape[0]
    if chunk_q is None:
        chunk_q = L                     # biggest query tile that fits VMEM at these sizes

    # --- hoisted weight preparation (transposes / splits done once, outside kernels) ---
    w0t = params["w0"].T                                                     # (I, H)
    ws_row = params["ws"]                                                    # (1, H)
    wih_f, wih_b = params["wih_f"], params["wih_b"]                          # (3H, 2I)
    w_vec = jnp.concatenate([wih_f[:, :I].T, wih_b[:, :I].T], axis=1)        # (I, 6H)
    w_p = jnp.concatenate([wih_f[:, I:].T, wih_b[:, I:].T], axis=1)          # (I, 6H)
    bih_all = jnp.concatenate([params["bih_f"], params["bih_b"]], axis=1)    # (1, 6H)
    whh_f_t = params["whh_f"].T                                              # (H, 3H)
    whh_b_t = params["whh_b"].T                                              # (H, 3H)

    p_bli = jnp.transpose(p_input, (1, 0, 2))                                # (B, L, I)
    mask_b1l = jnp.transpose(p_mask, (1, 0)).astype(jnp.float32)[:, None, :]  # (B, 1, L)

    # fused projection + attention + input->hidden GRU gates (both directions)
    gi_bl = attention_gi(p_bli, w0t, ws_row, mask_b1l, w_vec, w_p, bih_all, chunk_q)  # (B, L, 6H)
    gi_lb = jnp.transpose(gi_bl, (1, 0, 2))                                  # (L, B, 6H)

    # fused bidirectional GRU recurrence (only h @ Whh^T left on the serial path)
    out_f, out_b = bigru(gi_lb, whh_f_t, whh_b_t, params["bhh_f"], params["bhh_b"])
    return jnp.concatenate([out_f, out_b], axis=-1)                          # (L, B, 2H)


# ----------------------------------------------------------------------------- #
# Pure-JAX reference (for correctness check)
# ----------------------------------------------------------------------------- #
def reference_forward(params, p_input, p_mask):
    L, B, I = p_input.shape
    H = params["w0"].shape[0]
    v_p = jnp.einsum('lbi,hi->lbh', p_input, params["w0"])
    t = jnp.tanh(v_p[:, None, :, :] + v_p[None, :, :, :])          # (c, t, B, H)
    s = jnp.einsum('ctbh,h->ctb', t, params["ws"][0])
    s = jnp.where(p_mask[None, :, :], -jnp.inf, s)
    a = jax.nn.softmax(s, axis=1)
    vec = jnp.einsum('ctb,tbi->cbi', a, p_input)
    rnn_in = jnp.concatenate([vec, p_input], axis=-1)

    def gru_dir(x, wih, whh, bih, bhh, reverse):
        def step(h, xt):
            gi = xt @ wih.T + bih[0]
            gh = h @ whh.T + bhh[0]
            r = jax.nn.sigmoid(gi[:, :H] + gh[:, :H])
            z = jax.nn.sigmoid(gi[:, H:2 * H] + gh[:, H:2 * H])
            n = jnp.tanh(gi[:, 2 * H:] + r * gh[:, 2 * H:])
            hn = (1.0 - z) * n + z * h
            return hn, hn
        h0 = jnp.zeros((B, H), jnp.float32)
        xs = x[::-1] if reverse else x
        _, ys = lax.scan(step, h0, xs)
        return ys[::-1] if reverse else ys

    of = gru_dir(rnn_in, params["wih_f"], params["whh_f"],
                 params["bih_f"], params["bhh_f"], False)
    ob = gru_dir(rnn_in, params["wih_b"], params["whh_b"],
                 params["bih_b"], params["bhh_b"], True)
    return jnp.concatenate([of, ob], axis=-1)


if __name__ == "__main__":
    L, B, I, H = 16, 2, 32, 32     # max_doc_length, batch, input_size, hidden_size
    CHUNK_Q = 16                   # full query length (analogue of torch chunk_size=100)

    key = jax.random.PRNGKey(0)
    ks = jax.random.split(key, 12)
    sc = 0.1
    params = {
        "w0":    jax.random.normal(ks[0], (H, I), jnp.float32) * sc,       # attention_w[0]
        "ws":    jax.random.normal(ks[1], (1, H), jnp.float32) * sc,       # attention_s
        "wih_f": jax.random.normal(ks[2], (3 * H, 2 * I), jnp.float32) * sc,
        "whh_f": jax.random.normal(ks[3], (3 * H, H), jnp.float32) * sc,
        "bih_f": jax.random.normal(ks[4], (1, 3 * H), jnp.float32) * sc,
        "bhh_f": jax.random.normal(ks[5], (1, 3 * H), jnp.float32) * sc,
        "wih_b": jax.random.normal(ks[6], (3 * H, 2 * I), jnp.float32) * sc,
        "whh_b": jax.random.normal(ks[7], (3 * H, H), jnp.float32) * sc,
        "bih_b": jax.random.normal(ks[8], (1, 3 * H), jnp.float32) * sc,
        "bhh_b": jax.random.normal(ks[9], (1, 3 * H), jnp.float32) * sc,
    }
    # TODO(synk): nn.Dropout layers are treated as identity (eval mode); no RNG dropout in-kernel.

    p_input = jax.random.normal(ks[10], (L, B, I), jnp.float32)
    lengths = jnp.array([L, L - 4], dtype=jnp.int32)                       # batch 1 has 4 padded keys
    p_mask = jnp.arange(L)[:, None] >= lengths[None, :]                    # (L, B) bool, True = pad

    out = self_match_encoder_forward(params, p_input, p_mask, CHUNK_Q)
    out = jax.block_until_ready(out)

    ref = reference_forward(params, p_input, p_mask)
    assert out.shape == (L, B, 2 * H)
    assert jnp.allclose(out, ref, atol=2e-3, rtol=2e-3), "mismatch vs JAX reference"
    print("KERNEL_OK")
</pallas_src>

<mosaic_0001>
module attributes {stable_mosaic.version = 11 : i64} {
  func.func @_attn_gi_kernel(%arg0: i32, %arg1: i32, %arg2: memref<1x16x32xf32, #tpu.memory_space<vmem>>, %arg3: memref<1x16x32xf32, #tpu.memory_space<vmem>>, %arg4: memref<32x32xf32, #tpu.memory_space<vmem>>, %arg5: memref<1x32xf32, #tpu.memory_space<vmem>>, %arg6: memref<1x1x16xf32, #tpu.memory_space<vmem>>, %arg7: memref<32x192xf32, #tpu.memory_space<vmem>>, %arg8: memref<32x192xf32, #tpu.memory_space<vmem>>, %arg9: memref<1x192xf32, #tpu.memory_space<vmem>>, %arg10: memref<1x16x192xf32, #tpu.memory_space<vmem>>) attributes {dimension_semantics = [#tpu.dimension_semantics<parallel>, #tpu.dimension_semantics<parallel>], iteration_bounds = array<i64: 2, 1>, scalar_prefetch = 0 : i64, scratch_operands = 0 : i64, tpu.core_type = #tpu.core_type<tc>, window_params = [{transform_indices = @transform_0, window_bounds = array<i64: 1, 16, 32>}, {transform_indices = @transform_1, window_bounds = array<i64: 1, 16, 32>}, {pipeline_mode = #tpu.pipeline_mode<synchronous>, transform_indices = @transform_2, window_bounds = array<i64: 32, 32>}, {pipeline_mode = #tpu.pipeline_mode<synchronous>, transform_indices = @transform_3, window_bounds = array<i64: 1, 32>}, {transform_indices = @transform_4, window_bounds = array<i64: 1, 1, 16>}, {pipeline_mode = #tpu.pipeline_mode<synchronous>, transform_indices = @transform_5, window_bounds = array<i64: 32, 192>}, {pipeline_mode = #tpu.pipeline_mode<synchronous>, transform_indices = @transform_6, window_bounds = array<i64: 32, 192>}, {pipeline_mode = #tpu.pipeline_mode<synchronous>, transform_indices = @transform_7, window_bounds = array<i64: 1, 192>}, {transform_indices = @transform_8, window_bounds = array<i64: 1, 16, 192>}]} {
    %c0 = arith.constant 0 : index
    %c0_0 = arith.constant 0 : index
    %c0_1 = arith.constant 0 : index
    %0 = vector.load %arg2[%c0, %c0_0, %c0_1] : memref<1x16x32xf32, #tpu.memory_space<vmem>>, vector<1x16x32xf32>
    %1 = vector.shape_cast %0 : vector<1x16x32xf32> to vector<16x32xf32>
    %c0_2 = arith.constant 0 : index
    %c0_3 = arith.constant 0 : index
    %c0_4 = arith.constant 0 : index
    %2 = vector.load %arg3[%c0_2, %c0_3, %c0_4] : memref<1x16x32xf32, #tpu.memory_space<vmem>>, vector<1x16x32xf32>
    %3 = vector.shape_cast %2 : vector<1x16x32xf32> to vector<16x32xf32>
    %c0_5 = arith.constant 0 : index
    %c0_6 = arith.constant 0 : index
    %4 = vector.load %arg4[%c0_5, %c0_6] : memref<32x32xf32, #tpu.memory_space<vmem>>, vector<32x32xf32>
    %cst = arith.constant dense<0.000000e+00> : vector<16x32xf32>
    %5 = tpu.matmul %1, %4, %cst {dimension_numbers = #tpu.dot_dimension_numbers<[1], [0], [0], [1], [0, 0, 1, 1], [], []>} : vector<16x32xf32>, vector<32x32xf32>, vector<16x32xf32> -> vector<16x32xf32>
    %cst_7 = arith.constant dense<0.000000e+00> : vector<16x32xf32>
    %6 = tpu.matmul %3, %4, %cst_7 {dimension_numbers = #tpu.dot_dimension_numbers<[1], [0], [0], [1], [0, 0, 1, 1], [], []>} : vector<16x32xf32>, vector<32x32xf32>, vector<16x32xf32> -> vector<16x32xf32>
    %7 = vector.shape_cast %5 : vector<16x32xf32> to vector<16x1x32xf32>
    %8 = vector.shape_cast %6 : vector<16x32xf32> to vector<1x16x32xf32>
    %9 = vector.broadcast %7 : vector<16x1x32xf32> to vector<16x16x32xf32>
    %10 = vector.broadcast %8 : vector<1x16x32xf32> to vector<16x16x32xf32>
    %11 = arith.addf %9, %10 : vector<16x16x32xf32>
    %12 = math.tanh %11 : vector<16x16x32xf32>
    %c0_8 = arith.constant 0 : index
    %c0_9 = arith.constant 0 : index
    %13 = vector.load %arg5[%c0_8, %c0_9] : memref<1x32xf32, #tpu.memory_space<vmem>>, vector<1x32xf32>
    %14 = vector.shape_cast %13 : vector<1x32xf32> to vector<1x1x32xf32>
    %15 = vector.broadcast %14 : vector<1x1x32xf32> to vector<16x16x32xf32>
    %16 = arith.mulf %12, %15 : vector<16x16x32xf32>
    %cst_10 = arith.constant dense<0.000000e+00> : vector<16x16xf32>
    %17 = vector.multi_reduction <add>, %16, %cst_10 [2] : vector<16x16x32xf32> to vector<16x16xf32>
    %c0_11 = arith.constant 0 : index
    %c0_12 = arith.constant 0 : index
    %c0_13 = arith.constant 0 : index
    %18 = vector.load %arg6[%c0_11, %c0_12, %c0_13] : memref<1x1x16xf32, #tpu.memory_space<vmem>>, vector<1x1x16xf32>
    %19 = vector.shape_cast %18 : vector<1x1x16xf32> to vector<1x16xf32>
    %cst_14 = arith.constant 0.000000e+00 : f32
    %20 = vector.broadcast %cst_14 : f32 to vector<1x16xf32>
    %21 = arith.cmpf ogt, %19, %20 : vector<1x16xf32>
    %cst_15 = arith.constant -1.000000e+30 : f32
    %22 = vector.shape_cast %21 : vector<1x16xi1> to vector<1x16xi1>
    %23 = vector.broadcast %22 : vector<1x16xi1> to vector<16x16xi1>
    %24 = vector.broadcast %cst_15 : f32 to vector<16x16xf32>
    %25 = arith.select %23, %24, %17 : vector<16x16xi1>, vector<16x16xf32>
    %cst_16 = arith.constant dense<0xFF800000> : vector<16xf32>
    %26 = vector.multi_reduction <maximumf>, %25, %cst_16 [1] : vector<16x16xf32> to vector<16xf32>
    %27 = vector.shape_cast %26 : vector<16xf32> to vector<16x1xf32>
    %28 = vector.broadcast %27 : vector<16x1xf32> to vector<16x16xf32>
    %29 = arith.subf %25, %28 : vector<16x16xf32>
    %30 = math.exp %29 : vector<16x16xf32>
    %cst_17 = arith.constant dense<0.000000e+00> : vector<16xf32>
    %31 = vector.multi_reduction <add>, %30, %cst_17 [1] : vector<16x16xf32> to vector<16xf32>
    %32 = vector.shape_cast %31 : vector<16xf32> to vector<16x1xf32>
    %33 = tpu.reciprocal %32 {approx = true} : vector<16x1xf32> -> vector<16x1xf32>
    %34 = vector.broadcast %33 : vector<16x1xf32> to vector<16x16xf32>
    %35 = arith.mulf %30, %34 : vector<16x16xf32>
    %cst_18 = arith.constant dense<0.000000e+00> : vector<16x32xf32>
    %36 = tpu.matmul %35, %3, %cst_18 {dimension_numbers = #tpu.dot_dimension_numbers<[1], [0], [0], [1], [0, 0, 1, 1], [], []>} : vector<16x16xf32>, vector<16x32xf32>, vector<16x32xf32> -> vector<16x32xf32>
    %c0_19 = arith.constant 0 : index
    %c0_20 = arith.constant 0 : index
    %37 = vector.load %arg7[%c0_19, %c0_20] : memref<32x192xf32, #tpu.memory_space<vmem>>, vector<32x192xf32>
    %cst_21 = arith.constant dense<0.000000e+00> : vector<16x192xf32>
    %38 = tpu.matmul %36, %37, %cst_21 {dimension_numbers = #tpu.dot_dimension_numbers<[1], [0], [0], [1], [0, 0, 1, 1], [], []>} : vector<16x32xf32>, vector<32x192xf32>, vector<16x192xf32> -> vector<16x192xf32>
    %c0_22 = arith.constant 0 : index
    %c0_23 = arith.constant 0 : index
    %39 = vector.load %arg8[%c0_22, %c0_23] : memref<32x192xf32, #tpu.memory_space<vmem>>, vector<32x192xf32>
    %cst_24 = arith.constant dense<0.000000e+00> : vector<16x192xf32>
    %40 = tpu.matmul %1, %39, %cst_24 {dimension_numbers = #tpu.dot_dimension_numbers<[1], [0], [0], [1], [0, 0, 1, 1], [], []>} : vector<16x32xf32>, vector<32x192xf32>, vector<16x192xf32> -> vector<16x192xf32>
    %41 = arith.addf %38, %40 : vector<16x192xf32>
    %c0_25 = arith.constant 0 : index
    %c0_26 = arith.constant 0 : index
    %42 = vector.load %arg9[%c0_25, %c0_26] : memref<1x192xf32, #tpu.memory_space<vmem>>, vector<1x192xf32>
    %43 = vector.broadcast %42 : vector<1x192xf32> to vector<16x192xf32>
    %44 = arith.addf %41, %43 : vector<16x192xf32>
    %c0_27 = arith.constant 0 : index
    %c0_28 = arith.constant 0 : index
    %c0_29 = arith.constant 0 : index
    %45 = vector.load %arg10[%c0_27, %c0_28, %c0_29] : memref<1x16x192xf32, #tpu.memory_space<vmem>>, vector<1x16x192xf32>
    %46 = vector.shape_cast %45 : vector<1x16x192xf32> to vector<16x192xf32>
    %47 = vector.shape_cast %44 : vector<16x192xf32> to vector<1x16x192xf32>
    tpu.vector_store %arg10[%c0_27, %c0_28, %c0_29], %47 {strides = array<i32>} : memref<1x16x192xf32, #tpu.memory_space<vmem>>, vector<1x16x192xf32>,
    return
  }
  func.func @transform_0(%arg0: i32, %arg1: i32) -> (i32, i32, i32) {
    %c0_i32 = arith.constant 0 : i32
    %c0_i32_0 = arith.constant 0 : i32
    return %arg0, %arg1, %c0_i32 : i32, i32, i32
  }
  func.func @transform_1(%arg0: i32, %arg1: i32) -> (i32, i32, i32) {
    %c0_i32 = arith.constant 0 : i32
    %c0_i32_0 = arith.constant 0 : i32
    %c0_i32_1 = arith.constant 0 : i32
    return %arg0, %c0_i32, %c0_i32_0 : i32, i32, i32
  }
  func.func @transform_2(%arg0: i32, %arg1: i32) -> (i32, i32) {
    %c0_i32 = arith.constant 0 : i32
    %c0_i32_0 = arith.constant 0 : i32
    %c0_i32_1 = arith.constant 0 : i32
    return %c0_i32, %c0_i32_0 : i32, i32
  }
  func.func @transform_3(%arg0: i32, %arg1: i32) -> (i32, i32) {
    %c0_i32 = arith.constant 0 : i32
    %c0_i32_0 = arith.constant 0 : i32
    %c0_i32_1 = arith.constant 0 : i32
    return %c0_i32, %c0_i32_0 : i32, i32
  }
  func.func @transform_4(%arg0: i32, %arg1: i32) -> (i32, i32, i32) {
    %c0_i32 = arith.constant 0 : i32
    %c0_i32_0 = arith.constant 0 : i32
    %c0_i32_1 = arith.constant 0 : i32
    return %arg0, %c0_i32, %c0_i32_0 : i32, i32, i32
  }
  func.func @transform_5(%arg0: i32, %arg1: i32) -> (i32, i32) {
    %c0_i32 = arith.constant 0 : i32
    %c0_i32_0 = arith.constant 0 : i32
    %c0_i32_1 = arith.constant 0 : i32
    return %c0_i32, %c0_i32_0 : i32, i32
  }
  func.func @transform_6(%arg0: i32, %arg1: i32) -> (i32, i32) {
    %c0_i32 = arith.constant 0 : i32
    %c0_i32_0 = arith.constant 0 : i32
    %c0_i32_1 = arith.constant 0 : i32
    return %c0_i32, %c0_i32_0 : i32, i32
  }
  func.func @transform_7(%arg0: i32, %arg1: i32) -> (i32, i32) {
    %c0_i32 = arith.constant 0 : i32
    %c0_i32_0 = arith.constant 0 : i32
    %c0_i32_1 = arith.constant 0 : i32
    return %c0_i32, %c0_i32_0 : i32, i32
  }
  func.func @transform_8(%arg0: i32, %arg1: i32) -> (i32, i32, i32) {
    %c0_i32 = arith.constant 0 : i32
    %c0_i32_0 = arith.constant 0 : i32
    return %arg0, %arg1, %c0_i32 : i32, i32, i32
  }
}

</mosaic_0001>

<llo_original>
// kernel: tpu_custom_call.1
$region0: #{tpu_custom_call.1}
  #allocation0 [shape = 'u32[]', space=smem, size = 0x4, offset = 0x4, fixed_abs, tag = 'smem constant byte address 0x4 - core index']
  #allocation1 [shape = 'u32[72,128]{1,0:T(1,128)}', space=vmem, size = 0x9000, scoped, tag = 'internal scratch']
  %s0 = inlined_call_operand.hbm [shape: f32[2,16,32], index: 0, kind: input, shape index: {}]
  %s1 = inlined_call_operand.hbm [shape: f32[2,16,32], index: 1, kind: input, shape index: {}]
  %s2 = inlined_call_operand.hbm [shape: f32[32,32], index: 2, kind: input, shape index: {}]
  %s3 = inlined_call_operand.hbm [shape: f32[1,32], index: 3, kind: input, shape index: {}]
  %s4 = inlined_call_operand.vmem [shape: f32[2,1,16], index: 4, kind: input, shape index: {}]
  %s5 = inlined_call_operand.hbm [shape: f32[32,192], index: 5, kind: input, shape index: {}]
  %s6 = inlined_call_operand.hbm [shape: f32[32,192], index: 6, kind: input, shape index: {}]
  %s7 = inlined_call_operand.vmem [shape: f32[1,192], index: 7, kind: input, shape index: {}]
  %s8 = inlined_call_operand.hbm [shape: f32[2,16,192], index: 8, kind: output, shape index: {}]
  %s9 = sld [smem:[#allocation0]]
  $region89: #{tpu_custom_call.1} parent=0
    _
  %s11 = ssub.s32 1, %s9
  %s12 = scalar_select 0, %s11, %s9
  $region1: #{tpu_custom_call.1} parent=0
    #allocation2 [shape = 'u8[16384]{0}', space=vmem, size = 0x4000, scoped, tag = 'input window, operand 0']
    #allocation3 [shape = 's32[2]{0}', space=sflag, size = 0x8, scoped, tag = 'scoped memory for tpu_custom_call.1']
    #allocation4 [shape = 's32[2]{0}', space=sflag, size = 0x8, scoped, tag = 'scoped memory for tpu_custom_call.1']
    #allocation5 [shape = 'u8[16384]{0}', space=vmem, size = 0x4000, scoped, tag = 'input window, operand 1']
    #allocation6 [shape = 's32[2]{0}', space=sflag, size = 0x8, scoped, tag = 'scoped memory for tpu_custom_call.1']
    #allocation7 [shape = 'u8[16384]{0}', space=vmem, size = 0x4000, scoped, tag = 'input window, operand 2, single buffered']
    #allocation8 [shape = 'u8[512]{0}', space=vmem, size = 0x400, scoped, tag = 'input window, operand 3, single buffered']
    #allocation9 [shape = 's32[1]{0}', space=sflag, size = 0x4, scoped, tag = 'scoped memory for tpu_custom_call.1']
    #allocation10 [shape = 'u8[32768]{0}', space=vmem, size = 0x8000, scoped, tag = 'input window, operand 5, single buffered']
    #allocation11 [shape = 'u8[32768]{0}', space=vmem, size = 0x8000, scoped, tag = 'input window, operand 6, single buffered']
    #allocation12 [shape = 's32[1]{0}', space=sflag, size = 0x4, scoped, tag = 'scoped memory for tpu_custom_call.1']
    #allocation13 [shape = 'u8[32768]{0}', space=vmem, size = 0x8000, scoped, tag = 'output window, operand 0']
    %13 = vsyncpa [#allocation3], 0
    %s14 = scalar_lea.sflag [#allocation3], 1
    %15 = vsyncpa %s14, 0
    %16 = vsyncpa [#allocation6], 0
    %s17 = scalar_lea.sflag [#allocation6], 1
    %18 = vsyncpa %s17, 0
    %19 = vsyncpa [#allocation9], 0
    %20 = vsyncpa [#allocation12], 0
    %21 = vsyncpa [#allocation4], 0
    %s22 = scalar_lea.sflag [#allocation4], 1
    %23 = vsyncpa %s22, 0
    loop: start=0, step=1, limit=4
    $region2: #{tpu_custom_call.1} parent=1 // loop_pre_header
      _
    $region3: #{tpu_custom_call.1} parent=1 // loop_header
      %s25 = sphi 0, %s29
      %p26 = scmp.ge.s32.totalorder %s25, 4
      %s32 = sphi 0, %s44
      %s33 = sphi 0, %s40
      %s34 = sphi 0, %s32
      %s35 = sphi 0, %s33
      %s36 = sphi 0, %s34
      %s37 = sphi 0, %s35
      %s49 = sphi 0, %s51
      %s52 = sphi 0, %s49
      %s53 = sphi 0, %s52
      %s69 = sphi 0, %s53
      %s75 = sphi 0, %s77
      %s78 = sphi 0, %s75
      %s79 = sphi 0, %s78
      %s95 = sphi 0, %s79
      %s99 = sphi 0, %s99
      %s101 = sphi 0, %s99
      %s102 = sphi 0, %s101
      %s116 = sphi 0, %s102
      %s120 = sphi 0, %s120
      %s122 = sphi 0, %s120
      %s123 = sphi 0, %s122
      %s137 = sphi 0, %s123
      %s143 = sphi 0, %s145
      %s146 = sphi 0, %s143
      %s147 = sphi 0, %s146
      %s163 = sphi 0, %s147
      %s167 = sphi 0, %s167
      %s169 = sphi 0, %s167
      %s170 = sphi 0, %s169
      %s184 = sphi 0, %s170
      %s188 = sphi 0, %s188
      %s190 = sphi 0, %s188
      %s191 = sphi 0, %s190
      %s205 = sphi 0, %s191
      %s209 = sphi 0, %s209
      %s211 = sphi 0, %s209
      %s212 = sphi 0, %s211
      %s226 = sphi 0, %s212
      %s234 = sphi 0, %s236
      %s237 = sphi 0, %s234
      %s238 = sphi 0, %s237
      %s254 = sphi 0, %s238
    $region4: #{tpu_custom_call.1} parent=1 // loop_header_branch
      %28 = sbr.rel (%p26) target = $region8
    $region5: #{tpu_custom_call.1} parent=1 // loop_body
      %s30 = ssub.s32 %s25, 1
      %s31 = ssub.s32 %s25, 2
      %s38 = sadd.s32 1, %s33
      %p39 = scmp.ge.s32.totalorder %s38, 1
      %s40 = scalar_select %p39, 0, %s38
      %s41 = sadd.s32 1, %s32
      %s42 = scalar_select %p39, %s41, %s32
      %p43 = scmp.ge.s32.totalorder %s42, 2
      %s44 = scalar_select %p43, 0, %s42
      %s45 = ssub.s32 %s32, %s44
      %s46 = ssub.s32 %s33, %s40
      %s47 = sor.u32 %s45, %s46
      %p48 = scmp.eq.s32.totalorder %s47, 0
      %s50 = sadd.s32 %s49, 1
      %s51 = scalar_select %p48, %s49, %s50
      %p54 = pneg %p48
      %p55 = scmp.eq.s32.totalorder %s25, 1
      %p56 = por %p54, %p55
      %p57 = scmp.ne.s32.totalorder %s49, %s52
      %p58 = scmp.eq.s32.totalorder %s25, 0
      %p59 = por %p57, %p58
      %p60 = scmp.ne.s32.totalorder %s49, %s52
      %p61 = scmp.eq.s32.totalorder %s30, 1
      %p62 = por %p60, %p61
      %p63 = scmp.ne.s32.totalorder %s52, %s53
      %p64 = scmp.eq.s32.totalorder %s30, 0
      %p65 = por %p63, %p64
      %p66 = scmp.ne.s32.totalorder %s52, %s53
      %p67 = scmp.eq.s32.totalorder %s31, 1
      %p68 = por %p66, %p67
      %p70 = scmp.ne.s32.totalorder %s53, %s69
      %p71 = scmp.eq.s32.totalorder %s31, 0
      %p72 = por %p70, %p71
      %s73 = ssub.s32 %s32, %s44
      %p74 = scmp.eq.s32.totalorder %s73, 0
      %s76 = sadd.s32 %s75, 1
      %s77 = scalar_select %p74, %s75, %s76
      %p80 = pneg %p74
      %p81 = scmp.eq.s32.totalorder %s25, 1
      %p82 = por %p80, %p81
      %p83 = scmp.ne.s32.totalorder %s75, %s78
      %p84 = scmp.eq.s32.totalorder %s25, 0
      %p85 = por %p83, %p84
      %p86 = scmp.ne.s32.totalorder %s75, %s78
      %p87 = scmp.eq.s32.totalorder %s30, 1
      %p88 = por %p86, %p87
      %p89 = scmp.ne.s32.totalorder %s78, %s79
      %p90 = scmp.eq.s32.totalorder %s30, 0
      %p91 = por %p89, %p90
      %p92 = scmp.ne.s32.totalorder %s78, %s79
      %p93 = scmp.eq.s32.totalorder %s31, 1
      %p94 = por %p92, %p93
      %p96 = scmp.ne.s32.totalorder %s79, %s95
      %p97 = scmp.eq.s32.totalorder %s31, 0
      %p98 = por %p96, %p97
      %s100 = sadd.s32 %s99, 1
      %p103 = scmp.eq.s32.totalorder %s25, 1
      %p104 = scmp.ne.s32.totalorder %s99, %s101
      %p105 = scmp.eq.s32.totalorder %s25, 0
      %p106 = por %p104, %p105
      %p107 = scmp.ne.s32.totalorder %s99, %s101
      %p108 = scmp.eq.s32.totalorder %s30, 1
      %p109 = por %p107, %p108
      %p110 = scmp.ne.s32.totalorder %s101, %s102
      %p111 = scmp.eq.s32.totalorder %s30, 0
      %p112 = por %p110, %p111
      %p113 = scmp.ne.s32.totalorder %s101, %s102
      %p114 = scmp.eq.s32.totalorder %s31, 1
      %p115 = por %p113, %p114
      %p117 = scmp.ne.s32.totalorder %s102, %s116
      %p118 = scmp.eq.s32.totalorder %s31, 0
      %p119 = por %p117, %p118
      %s121 = sadd.s32 %s120, 1
      %p124 = scmp.eq.s32.totalorder %s25, 1
      %p125 = scmp.ne.s32.totalorder %s120, %s122
      %p126 = scmp.eq.s32.totalorder %s25, 0
      %p127 = por %p125, %p126
      %p128 = scmp.ne.s32.totalorder %s120, %s122
      %p129 = scmp.eq.s32.totalorder %s30, 1
      %p130 = por %p128, %p129
      %p131 = scmp.ne.s32.totalorder %s122, %s123
      %p132 = scmp.eq.s32.totalorder %s30, 0
      %p133 = por %p131, %p132
      %p134 = scmp.ne.s32.totalorder %s122, %s123
      %p135 = scmp.eq.s32.totalorder %s31, 1
      %p136 = por %p134, %p135
      %p138 = scmp.ne.s32.totalorder %s123, %s137
      %p139 = scmp.eq.s32.totalorder %s31, 0
      %p140 = por %p138, %p139
      %s141 = ssub.s32 %s32, %s44
      %p142 = scmp.eq.s32.totalorder %s141, 0
      %s144 = sadd.s32 %s143, 1
      %s145 = scalar_select %p142, %s143, %s144
      %p148 = pneg %p142
      %p149 = scmp.eq.s32.totalorder %s25, 1
      %p150 = por %p148, %p149
      %p151 = scmp.ne.s32.totalorder %s143, %s146
      %p152 = scmp.eq.s32.totalorder %s25, 0
      %p153 = por %p151, %p152
      %p154 = scmp.ne.s32.totalorder %s143, %s146
      %p155 = scmp.eq.s32.totalorder %s30, 1
      %p156 = por %p154, %p155
      %p157 = scmp.ne.s32.totalorder %s146, %s147
      %p158 = scmp.eq.s32.totalorder %s30, 0
      %p159 = por %p157, %p158
      %p160 = scmp.ne.s32.totalorder %s146, %s147
      %p161 = scmp.eq.s32.totalorder %s31, 1
      %p162 = por %p160, %p161
      %p164 = scmp.ne.s32.totalorder %s147, %s163
      %p165 = scmp.eq.s32.totalorder %s31, 0
      %p166 = por %p164, %p165
      %s168 = sadd.s32 %s167, 1
      %p171 = scmp.eq.s32.totalorder %s25, 1
      %p172 = scmp.ne.s32.totalorder %s167, %s169
      %p173 = scmp.eq.s32.totalorder %s25, 0
      %p174 = por %p172, %p173
      %p175 = scmp.ne.s32.totalorder %s167, %s169
      %p176 = scmp.eq.s32.totalorder %s30, 1
      %p177 = por %p175, %p176
      %p178 = scmp.ne.s32.totalorder %s169, %s170
      %p179 = scmp.eq.s32.totalorder %s30, 0
      %p180 = por %p178, %p179
      %p181 = scmp.ne.s32.totalorder %s169, %s170
      %p182 = scmp.eq.s32.totalorder %s31, 1
      %p183 = por %p181, %p182
      %p185 = scmp.ne.s32.totalorder %s170, %s184
      %p186 = scmp.eq.s32.totalorder %s31, 0
      %p187 = por %p185, %p186
      %s189 = sadd.s32 %s188, 1
      %p192 = scmp.eq.s32.totalorder %s25, 1
      %p193 = scmp.ne.s32.totalorder %s188, %s190
      %p194 = scmp.eq.s32.totalorder %s25, 0
      %p195 = por %p193, %p194
      %p196 = scmp.ne.s32.totalorder %s188, %s190
      %p197 = scmp.eq.s32.totalorder %s30, 1
      %p198 = por %p196, %p197
      %p199 = scmp.ne.s32.totalorder %s190, %s191
      %p200 = scmp.eq.s32.totalorder %s30, 0
      %p201 = por %p199, %p200
      %p202 = scmp.ne.s32.totalorder %s190, %s191
      %p203 = scmp.eq.s32.totalorder %s31, 1
      %p204 = por %p202, %p203
      %p206 = scmp.ne.s32.totalorder %s191, %s205
      %p207 = scmp.eq.s32.totalorder %s31, 0
      %p208 = por %p206, %p207
      %s210 = sadd.s32 %s209, 1
      %p213 = scmp.eq.s32.totalorder %s25, 1
      %p214 = scmp.ne.s32.totalorder %s209, %s211
      %p215 = scmp.eq.s32.totalorder %s25, 0
      %p216 = por %p214, %p215
      %p217 = scmp.ne.s32.totalorder %s209, %s211
      %p218 = scmp.eq.s32.totalorder %s30, 1
      %p219 = por %p217, %p218
      %p220 = scmp.ne.s32.totalorder %s211, %s212
      %p221 = scmp.eq.s32.totalorder %s30, 0
      %p222 = por %p220, %p221
      %p223 = scmp.ne.s32.totalorder %s211, %s212
      %p224 = scmp.eq.s32.totalorder %s31, 1
      %p225 = por %p223, %p224
      %p227 = scmp.ne.s32.totalorder %s212, %s226
      %p228 = scmp.eq.s32.totalorder %s31, 0
      %p229 = por %p227, %p228
      %s230 = ssub.s32 %s32, %s44
      %s231 = ssub.s32 %s33, %s40
      %s232 = sor.u32 %s230, %s231
      %p233 = scmp.eq.s32.totalorder %s232, 0
      %s235 = sadd.s32 %s234, 1
      %s236 = scalar_select %p233, %s234, %s235
      %p239 = pneg %p233
      %p240 = scmp.eq.s32.totalorder %s25, 1
      %p241 = por %p239, %p240
      %p242 = scmp.ne.s32.totalorder %s234, %s237
      %p243 = scmp.eq.s32.totalorder %s25, 0
      %p244 = por %p242, %p243
      %p245 = scmp.ne.s32.totalorder %s234, %s237
      %p246 = scmp.eq.s32.totalorder %s30, 1
      %p247 = por %p245, %p246
      %p248 = scmp.ne.s32.totalorder %s237, %s238
      %p249 = scmp.eq.s32.totalorder %s30, 0
      %p250 = por %p248, %p249
      %p251 = scmp.ne.s32.totalorder %s237, %s238
      %p252 = scmp.eq.s32.totalorder %s31, 1
      %p253 = por %p251, %p252
      %p255 = scmp.ne.s32.totalorder %s238, %s254
      %p256 = scmp.eq.s32.totalorder %s31, 0
      %p257 = por %p255, %p256
      %p258 = scmp.le.s32.totalorder 1, %s25
      %p259 = scmp.lt.s32.totalorder %s25, 3
      %p260 = pnand %p258, %p259
      %p261 = pneg %p260
      // Predicated region
      $region9: #{tpu_custom_call.1} parent=5 // pred_check
        _
      $region10: #{tpu_custom_call.1} parent=5 // pred_check_branch
        %263 = sbr.rel (%p260) target = $region12
      $region11: #{tpu_custom_call.1} parent=5 // pred_region
        %s264 = ssub.s32 %s25, 1
        // Predicated region
        $region13: #{tpu_custom_call.1} parent=11 // pred_check
          %p265 = pneg %p112
        $region14: #{tpu_custom_call.1} parent=11 // pred_check_branch
          %267 = sbr.rel (%p265) target = $region16
        $region15: #{tpu_custom_call.1} parent=11 // pred_region
          %269 = vsyncadd [#allocation6], 0
          %s270 = sshll.u32 %s2, 4
          %s271 = int_to_ptr.hbm [resolvable:$true] %s270
          %s272 = sshll.u32 [#allocation7], 4
          %s273 = int_to_ptr.vmem [resolvable:$true] %s272
          %278 = dma.hbm_to_vmem [thread:$0]  %s271, 512, %s273, [#allocation6], 128, 128, 8
        $region16: #{tpu_custom_call.1} parent=11 // pred_fallthru
          _
        // Predicated region
        $region17: #{tpu_custom_call.1} parent=11 // pred_check
          %p279 = pneg %p133
        $region18: #{tpu_custom_call.1} parent=11 // pred_check_branch
          %281 = sbr.rel (%p279) target = $region20
        $region19: #{tpu_custom_call.1} parent=11 // pred_region
          %283 = vsyncadd [#allocation9], 0
          %s285 = sshll.u32 %s3, 4
          %s286 = int_to_ptr.hbm [resolvable:$true] %s285
          %s287 = sshll.u32 [#allocation8], 4
          %s288 = int_to_ptr.vmem [resolvable:$true] %s287
          %290 = dma.hbm_to_vmem [thread:$0]  %s286, 16, %s288, [#allocation9]
        $region20: #{tpu_custom_call.1} parent=11 // pred_fallthru
          _
        // Predicated region
        $region21: #{tpu_custom_call.1} parent=11 // pred_check
          %p291 = pneg %p180
        $region22: #{tpu_custom_call.1} parent=11 // pred_check_branch
          %293 = sbr.rel (%p291) target = $region24
        $region23: #{tpu_custom_call.1} parent=11 // pred_region
          %295 = vsyncadd [#allocation9], 0
          %s296 = sshll.u32 %s5, 4
          %s297 = int_to_ptr.hbm [resolvable:$true] %s296
          %s298 = sshll.u32 [#allocation10], 4
          %s299 = int_to_ptr.vmem [resolvable:$true] %s298
          %304 = dma.hbm_to_vmem [thread:$0]  %s297, 1024, %s299, [#allocation9], 256, 256, 16
        $region24: #{tpu_custom_call.1} parent=11 // pred_fallthru
          _
        // Predicated region
        $region25: #{tpu_custom_call.1} parent=11 // pred_check
          %p305 = pneg %p201
        $region26: #{tpu_custom_call.1} parent=11 // pred_check_branch
          %307 = sbr.rel (%p305) target = $region28
        $region27: #{tpu_custom_call.1} parent=11 // pred_region
          %309 = vsyncadd [#allocation12], 0
          %s310 = sshll.u32 %s6, 4
          %s311 = int_to_ptr.hbm [resolvable:$true] %s310
          %s312 = sshll.u32 [#allocation11], 4
          %s313 = int_to_ptr.vmem [resolvable:$true] %s312
          %318 = dma.hbm_to_vmem [thread:$0]  %s311, 1024, %s313, [#allocation12], 256, 256, 16
        $region28: #{tpu_custom_call.1} parent=11 // pred_fallthru
          _
        // Predicated region
        $region29: #{tpu_custom_call.1} parent=11 // pred_check
          %p319 = pneg %p222
        $region30: #{tpu_custom_call.1} parent=11 // pred_check_branch
          %321 = sbr.rel (%p319) target = $region32
        $region31: #{tpu_custom_call.1} parent=11 // pred_region
          _
        $region32: #{tpu_custom_call.1} parent=11 // pred_fallthru
          _
      $region12: #{tpu_custom_call.1} parent=5 // pred_fallthru
        _
      %p322 = scmp.lt.s32.totalorder %s25, 2
      // Predicated region
      $region33: #{tpu_custom_call.1} parent=5 // pred_check
        %p323 = pneg %p322
      $region34: #{tpu_custom_call.1} parent=5 // pred_check_branch
        %325 = sbr.rel (%p323) target = $region36
      $region35: #{tpu_custom_call.1} parent=5 // pred_region
        // Predicated region
        $region37: #{tpu_custom_call.1} parent=35 // pred_check
          %p326 = pneg %p59
        $region38: #{tpu_custom_call.1} parent=35 // pred_check_branch
          %328 = sbr.rel (%p326) target = $region40
        $region39: #{tpu_custom_call.1} parent=35 // pred_region
          %s329 = sand.u32 %s49, 1
          %s330 = scalar_lea.sflag [#allocation3], %s329
          %s331 = sand.u32 %s49, 1
          %s332 = smul.addr %s331, 16
          %s333 = scalar_lea.vmem [#allocation2], %s332
          %s334 = smul.u32 2, %s33
          %336 = vsyncadd %s330, 0
          %s337 = smul.addr %s32, 2
          %s338 = sadd.s32 %s334, %s337
          %s339 = smul.addr %s338, 8
          %s340 = scalar_lea.hbm %s0, %s339
          %s341 = sshll.u32 %s340, 4
          %s342 = int_to_ptr.hbm [resolvable:$true] %s341
          %s343 = sshll.u32 %s333, 4
          %s344 = int_to_ptr.vmem [resolvable:$true] %s343
          %349 = dma.hbm_to_vmem [thread:$0]  %s342, 256, %s344, %s330, 128, 128, 8
        $region40: #{tpu_custom_call.1} parent=35 // pred_fallthru
          _
        // Predicated region
        $region41: #{tpu_custom_call.1} parent=35 // pred_check
          %p350 = pneg %p85
        $region42: #{tpu_custom_call.1} parent=35 // pred_check_branch
          %352 = sbr.rel (%p350) target = $region44
        $region43: #{tpu_custom_call.1} parent=35 // pred_region
          %s353 = sand.u32 %s25, 1
          %s354 = scalar_lea.sflag [#allocation6], %s353
          %s355 = sand.u32 %s75, 1
          %s356 = smul.addr %s355, 16
          %s357 = scalar_lea.vmem [#allocation5], %s356
          %359 = vsyncadd %s354, 0
          %s360 = smul.addr %s32, 2
          %s361 = smul.addr %s360, 8
          %s362 = scalar_lea.hbm %s1, %s361
          %s363 = sshll.u32 %s362, 4
          %s364 = int_to_ptr.hbm [resolvable:$true] %s363
          %s365 = sshll.u32 %s357, 4
          %s366 = int_to_ptr.vmem [resolvable:$true] %s365
          %371 = dma.hbm_to_vmem [thread:$0]  %s364, 256, %s366, %s354, 128, 128, 8
        $region44: #{tpu_custom_call.1} parent=35 // pred_fallthru
          _
        // Predicated region
        $region45: #{tpu_custom_call.1} parent=35 // pred_check
          %p372 = pneg %p153
        $region46: #{tpu_custom_call.1} parent=35 // pred_check_branch
          %374 = sbr.rel (%p372) target = $region48
        $region47: #{tpu_custom_call.1} parent=35 // pred_region
          %p375 = scmp.lt.s32.totalorder %s32, 1
          %s376 = scalar_select %p375, %s32, 1
          %s377 = scalar_lea.vmem %s4, %s376
        $region48: #{tpu_custom_call.1} parent=35 // pred_fallthru
          _
      $region36: #{tpu_custom_call.1} parent=5 // pred_fallthru
        _
      %p378 = scmp.le.s32.totalorder 1, %s25
      %p379 = scmp.lt.s32.totalorder %s25, 3
      %p380 = pnand %p378, %p379
      %p381 = pneg %p380
      // Predicated region
      $region49: #{tpu_custom_call.1} parent=5 // pred_check
        _
      $region50: #{tpu_custom_call.1} parent=5 // pred_check_branch
        %383 = sbr.rel (%p380) target = $region52
      $region51: #{tpu_custom_call.1} parent=5 // pred_region
        %s384 = ssub.s32 %s25, 1
        %s385 = sand.u32 %s52, 1
        %s386 = scalar_lea.sflag [#allocation3], %s385
        %s387 = sand.u32 %s52, 1
        %s388 = smul.addr %s387, 16
        %s389 = scalar_lea.vmem [#allocation2], %s388
        // Predicated region
        $region53: #{tpu_custom_call.1} parent=51 // pred_check
          %p390 = pneg %p65
        $region54: #{tpu_custom_call.1} parent=51 // pred_check_branch
          %392 = sbr.rel (%p390) target = $region56
        $region55: #{tpu_custom_call.1} parent=51 // pred_region
          %394 = dma.done %s386, 256
        $region56: #{tpu_custom_call.1} parent=51 // pred_fallthru
          _
        %s395 = sand.u32 %s30, 1
        %s396 = scalar_lea.sflag [#allocation6], %s395
        %s397 = sand.u32 %s78, 1
        %s398 = smul.addr %s397, 16
        %s399 = scalar_lea.vmem [#allocation5], %s398
        // Predicated region
        $region57: #{tpu_custom_call.1} parent=51 // pred_check
          %p400 = pneg %p91
        $region58: #{tpu_custom_call.1} parent=51 // pred_check_branch
          %402 = sbr.rel (%p400) target = $region60
        $region59: #{tpu_custom_call.1} parent=51 // pred_region
          %404 = dma.done %s396, 256
        $region60: #{tpu_custom_call.1} parent=51 // pred_fallthru
          _
        // Predicated region
        $region61: #{tpu_custom_call.1} parent=51 // pred_check
          %p405 = pneg %p112
        $region62: #{tpu_custom_call.1} parent=51 // pred_check_branch
          %407 = sbr.rel (%p405) target = $region64
        $region63: #{tpu_custom_call.1} parent=51 // pred_region
          %409 = dma.done [#allocation6], 512
        $region64: #{tpu_custom_call.1} parent=51 // pred_fallthru
          _
        // Predicated region
        $region65: #{tpu_custom_call.1} parent=51 // pred_check
          %p410 = pneg %p133
        $region66: #{tpu_custom_call.1} parent=51 // pred_check_branch
          %412 = sbr.rel (%p410) target = $region68
        $region67: #{tpu_custom_call.1} parent=51 // pred_region
          %414 = dma.done [#allocation9], 16
        $region68: #{tpu_custom_call.1} parent=51 // pred_fallthru
          _
        // Predicated region
        $region69: #{tpu_custom_call.1} parent=51 // pred_check
          %p415 = pneg %p180
        $region70: #{tpu_custom_call.1} parent=51 // pred_check_branch
          %417 = sbr.rel (%p415) target = $region72
        $region71: #{tpu_custom_call.1} parent=51 // pred_region
          %419 = dma.done [#allocation9], 1024
        $region72: #{tpu_custom_call.1} parent=51 // pred_fallthru
          _
        // Predicated region
        $region73: #{tpu_custom_call.1} parent=51 // pred_check
          %p420 = pneg %p201
        $region74: #{tpu_custom_call.1} parent=51 // pred_check_branch
          %422 = sbr.rel (%p420) target = $region76
        $region75: #{tpu_custom_call.1} parent=51 // pred_region
          %424 = dma.done [#allocation12], 1024
        $region76: #{tpu_custom_call.1} parent=51 // pred_fallthru
          _
        %s425 = sand.u32 %s52, 1
        %s426 = scalar_lea.sflag [#allocation3], %s425
        %s427 = sand.u32 %s52, 1
        %s428 = smul.addr %s427, 16
        %s429 = scalar_lea.vmem [#allocation2], %s428
        %p430 = pneg %p65
        %p431 = pneg %p62
        %s432 = sand.u32 %s30, 1
        %s433 = scalar_lea.sflag [#allocation6], %s432
        %s434 = sand.u32 %s78, 1
        %s435 = smul.addr %s434, 16
        %s436 = scalar_lea.vmem [#allocation5], %s435
        %p437 = pneg %p91
        %p438 = pneg %p88
        %p439 = pneg %p112
        %p440 = pneg %p109
        %p441 = pneg %p133
        %p442 = pneg %p130
        %p443 = scmp.lt.s32.totalorder %s34, 1
        %s444 = scalar_select %p443, %s34, 1
        %s445 = scalar_lea.vmem %s4, %s444
        %p446 = pneg %p159
        %p447 = pneg %p156
        %p448 = pneg %p180
        %p449 = pneg %p177
        %p450 = pneg %p201
        %p451 = pneg %p198
        %p452 = pneg %p222
        %p453 = pneg %p219
        %p454 = pneg %p250
        %p455 = pneg %p247
        %s456 = sand.u32 %s237, 1
        %s457 = scalar_lea.sflag [#allocation4], %s456
        %s458 = sand.u32 %s237, 1
        %s459 = smul.addr %s458, 32
        %s460 = scalar_lea.vmem [#allocation13], %s459
        %s461 = smul.u32 2, %s35
        %p462 = scmp.lt.s32.totalorder %s34, 1
        %s463 = scalar_select %p462, %s34, 1
        %s464 = scalar_lea.vmem %s4, %s463
        %s465 = smul.u32 2, %s35
        %v466 = vld [vmem:[%s389] sm:$0xff]
        %v467 = vld [vmem:[%s389 + $0x8] sm:$0xff]
        %v468 = vld [vmem:[%s399] sm:$0xff]
        %v469 = vld [vmem:[%s399 + $0x8] sm:$0xff]
        %v470 = vld [vmem:[#allocation7] sm:$0xff]
        %v471 = vld [vmem:[#allocation7 + $0x8] sm:$0xff]
        %v472 = vld [vmem:[#allocation7 + $0x10] sm:$0xff]
        %v473 = vld [vmem:[#allocation7 + $0x18] sm:$0xff]
        %vm474 = vcmask 261120
        %v476 = vsel %vm474, %v466, 0
        %v479 = vsel %vm474, %v467, 0
        %481 = vmatpush.msra.mxu0 0.0
        %482 = vmatpush.msra.mxu0 0.0
        %483 = vmatpush.msra.mxu0 0.0
        %484 = vmatpush.msra.mxu0 0.0
        %485 = vmatpush.msra.mxu0 0.0
        %486 = vmatpush.msra.mxu0 0.0
        %487 = vmatpush.msra.mxu0 0.0
        %488 = vmatpush.msra.mxu0 0.0
        %489 = vmatpush.msra.mxu0 0.0
        %490 = vmatpush.msra.mxu0 0.0
        %491 = vmatpush.msra.mxu0 0.0
        %492 = vmatpush.msra.mxu0 0.0
        %493 = vmatpush.msra.mxu0 %v473
        %494 = vmatpush.msra.mxu0 %v472
        %495 = vmatpush.msra.mxu0 %v471
        %496 = vmatpush.msra.mxu0 %v470
        %497 = vmatmul.f32.gmra.mxu0 %v476
        %v498 = vpop.f32.mrf.mxu0
        %v499 = vadd.f32 0.0, %v498
        %500 = vmatmul.f32.gmra.mxu0 %v479
        %v501 = vpop.f32.mrf.mxu0
        %v502 = vadd.f32 0.0, %v501
        %503 = vdwg.mxu0
        %v505 = vsel %vm474, %v468, 0
        %v508 = vsel %vm474, %v469, 0
        %510 = vmatpush.msra.mxu0 0.0
        %511 = vmatpush.msra.mxu0 0.0
        %512 = vmatpush.msra.mxu0 0.0
        %513 = vmatpush.msra.mxu0 0.0
        %514 = vmatpush.msra.mxu0 0.0
        %515 = vmatpush.msra.mxu0 0.0
        %516 = vmatpush.msra.mxu0 0.0
        %517 = vmatpush.msra.mxu0 0.0
        %518 = vmatpush.msra.mxu0 0.0
        %519 = vmatpush.msra.mxu0 0.0
        %520 = vmatpush.msra.mxu0 0.0
        %521 = vmatpush.msra.mxu0 0.0
        %522 = vmatpush.msra.mxu0 %v473
        %523 = vmatpush.msra.mxu0 %v472
        %524 = vmatpush.msra.mxu0 %v471
        %525 = vmatpush.msra.mxu0 %v470
        %526 = vmatmul.f32.gmra.mxu0 %v505
        %v527 = vpop.f32.mrf.mxu0
        %v528 = vadd.f32 0.0, %v527
        %529 = vmatmul.f32.gmra.mxu0 %v508
        %v530 = vpop.f32.mrf.mxu0
        %v531 = vadd.f32 0.0, %v530
        %532 = vdwg.mxu0
        %v535 = vrot.slane %v499, 1
        %v536 = vrot.slane %v499, 2
        %v537 = vrot.slane %v499, 3
        %v538 = vrot.slane %v499, 4
        %v539 = vrot.slane %v499, 5
        %v540 = vrot.slane %v499, 6
        %v541 = vrot.slane %v499, 7
        %v542 = vrot.slane %v502, 1
        %v543 = vrot.slane %v502, 2
        %v544 = vrot.slane %v502, 3
        %v545 = vrot.slane %v502, 4
        %v546 = vrot.slane %v502, 5
        %v547 = vrot.slane %v502, 6
        %v548 = vrot.slane %v502, 7
        %v549 = vperm.slane %v499, 0
        %v550 = vperm.slane %v535, 0
        %v551 = vperm.slane %v536, 0
        %v552 = vperm.slane %v537, 0
        %v553 = vperm.slane %v538, 0
        %v554 = vperm.slane %v539, 0
        %v555 = vperm.slane %v540, 0
        %v556 = vperm.slane %v541, 0
        %v557 = vperm.slane %v502, 0
        %v558 = vperm.slane %v542, 0
        %v559 = vperm.slane %v543, 0
        %v560 = vperm.slane %v544, 0
        %v561 = vperm.slane %v545, 0
        %v562 = vperm.slane %v546, 0
        %v563 = vperm.slane %v547, 0
        %v564 = vperm.slane %v548, 0
        %v581 = vadd.f32 %v549, %v528
        %v582 = vadd.f32 %v549, %v531
        %v583 = vadd.f32 %v550, %v528
        %v584 = vadd.f32 %v550, %v531
        %v585 = vadd.f32 %v551, %v528
        %v586 = vadd.f32 %v551, %v531
        %v587 = vadd.f32 %v552, %v528
        %v588 = vadd.f32 %v552, %v531
        %v589 = vadd.f32 %v553, %v528
        %v590 = vadd.f32 %v553, %v531
        %v591 = vadd.f32 %v554, %v528
        %v592 = vadd.f32 %v554, %v531
        %v593 = vadd.f32 %v555, %v528
        %v594 = vadd.f32 %v555, %v531
        %v595 = vadd.f32 %v556, %v528
        %v596 = vadd.f32 %v556, %v531
        %v597 = vadd.f32 %v557, %v528
        %v598 = vadd.f32 %v557, %v531
        %v599 = vadd.f32 %v558, %v528
        %v600 = vadd.f32 %v558, %v531
        %v601 = vadd.f32 %v559, %v528
        %v602 = vadd.f32 %v559, %v531
        %v603 = vadd.f32 %v560, %v528
        %v604 = vadd.f32 %v560, %v531
        %v605 = vadd.f32 %v561, %v528
        %v606 = vadd.f32 %v561, %v531
        %v607 = vadd.f32 %v562, %v528
        %v608 = vadd.f32 %v562, %v531
        %v609 = vadd.f32 %v563, %v528
        %v610 = vadd.f32 %v563, %v531
        %v611 = vadd.f32 %v564, %v528
        %v612 = vadd.f32 %v564, %v531
        %v613 = vtanh.pop %v581
        %v614 = vtanh.pop %v582
        %v615 = vtanh.pop %v583
        %v616 = vtanh.pop %v584
        %v617 = vtanh.pop %v585
        %v618 = vtanh.pop %v586
        %v619 = vtanh.pop %v587
        %v620 = vtanh.pop %v588
        %v621 = vtanh.pop %v589
        %v622 = vtanh.pop %v590
        %v623 = vtanh.pop %v591
        %v624 = vtanh.pop %v592
        %v625 = vtanh.pop %v593
        %v626 = vtanh.pop %v594
        %v627 = vtanh.pop %v595
        %v628 = vtanh.pop %v596
        %v629 = vtanh.pop %v597
        %v630 = vtanh.pop %v598
        %v631 = vtanh.pop %v599
        %v632 = vtanh.pop %v600
        %v633 = vtanh.pop %v601
        %v634 = vtanh.pop %v602
        %v635 = vtanh.pop %v603
        %v636 = vtanh.pop %v604
        %v637 = vtanh.pop %v605
        %v638 = vtanh.pop %v606
        %v639 = vtanh.pop %v607
        %v640 = vtanh.pop %v608
        %v641 = vtanh.pop %v609
        %v642 = vtanh.pop %v610
        %v643 = vtanh.pop %v611
        %v644 = vtanh.pop %v612
        %v645 = vld [vmem:[#allocation8] sm:$0x1]
        %v647 = vperm.slane %v645, 0
        %v649 = vmul.f32 %v613, %v647
        %v650 = vmul.f32 %v614, %v647
        %v651 = vmul.f32 %v615, %v647
        %v652 = vmul.f32 %v616, %v647
        %v653 = vmul.f32 %v617, %v647
        %v654 = vmul.f32 %v618, %v647
        %v655 = vmul.f32 %v619, %v647
        %v656 = vmul.f32 %v620, %v647
        %v657 = vmul.f32 %v621, %v647
        %v658 = vmul.f32 %v622, %v647
        %v659 = vmul.f32 %v623, %v647
        %v660 = vmul.f32 %v624, %v647
        %v661 = vmul.f32 %v625, %v647
        %v662 = vmul.f32 %v626, %v647
        %v663 = vmul.f32 %v627, %v647
        %v664 = vmul.f32 %v628, %v647
        %v665 = vmul.f32 %v629, %v647
        %v666 = vmul.f32 %v630, %v647
        %v667 = vmul.f32 %v631, %v647
        %v668 = vmul.f32 %v632, %v647
        %v669 = vmul.f32 %v633, %v647
        %v670 = vmul.f32 %v634, %v647
        %v671 = vmul.f32 %v635, %v647
        %v672 = vmul.f32 %v636, %v647
        %v673 = vmul.f32 %v637, %v647
        %v674 = vmul.f32 %v638, %v647
        %v675 = vmul.f32 %v639, %v647
        %v676 = vmul.f32 %v640, %v647
        %v677 = vmul.f32 %v641, %v647
        %v678 = vmul.f32 %v642, %v647
        %v679 = vmul.f32 %v643, %v647
        %v680 = vmul.f32 %v644, %v647
        %v681 = vsel %vm474, %v649, 0.0
        %682 = vadd.xlane.f32.xlu0 %v681
        %v683 = vpop.xlane.xlu0 %682
        %v684 = vsel %vm474, %v650, 0.0
        %685 = vadd.xlane.f32.xlu0 %v684
        %v686 = vpop.xlane.xlu0 %685
        %v687 = vsel %vm474, %v651, 0.0
        %688 = vadd.xlane.f32.xlu0 %v687
        %v689 = vpop.xlane.xlu0 %688
        %v690 = vsel %vm474, %v652, 0.0
        %691 = vadd.xlane.f32.xlu0 %v690
        %v692 = vpop.xlane.xlu0 %691
        %v693 = vsel %vm474, %v653, 0.0
        %694 = vadd.xlane.f32.xlu0 %v693
        %v695 = vpop.xlane.xlu0 %694
        %v696 = vsel %vm474, %v654, 0.0
        %697 = vadd.xlane.f32.xlu0 %v696
        %v698 = vpop.xlane.xlu0 %697
        %v699 = vsel %vm474, %v655, 0.0
        %700 = vadd.xlane.f32.xlu0 %v699
        %v701 = vpop.xlane.xlu0 %700
        %v702 = vsel %vm474, %v656, 0.0
        %703 = vadd.xlane.f32.xlu0 %v702
        %v704 = vpop.xlane.xlu0 %703
        %v705 = vsel %vm474, %v657, 0.0
        %706 = vadd.xlane.f32.xlu0 %v705
        %v707 = vpop.xlane.xlu0 %706
        %v708 = vsel %vm474, %v658, 0.0
        %709 = vadd.xlane.f32.xlu0 %v708
        %v710 = vpop.xlane.xlu0 %709
        %v711 = vsel %vm474, %v659, 0.0
        %712 = vadd.xlane.f32.xlu0 %v711
        %v713 = vpop.xlane.xlu0 %712
        %v714 = vsel %vm474, %v660, 0.0
        %715 = vadd.xlane.f32.xlu0 %v714
        %v716 = vpop.xlane.xlu0 %715
        %v717 = vsel %vm474, %v661, 0.0
        %718 = vadd.xlane.f32.xlu0 %v717
        %v719 = vpop.xlane.xlu0 %718
        %v720 = vsel %vm474, %v662, 0.0
        %721 = vadd.xlane.f32.xlu0 %v720
        %v722 = vpop.xlane.xlu0 %721
        %v723 = vsel %vm474, %v663, 0.0
        %724 = vadd.xlane.f32.xlu0 %v723
        %v725 = vpop.xlane.xlu0 %724
        %v726 = vsel %vm474, %v664, 0.0
        %727 = vadd.xlane.f32.xlu0 %v726
        %v728 = vpop.xlane.xlu0 %727
        %v729 = vsel %vm474, %v665, 0.0
        %730 = vadd.xlane.f32.xlu0 %v729
        %v731 = vpop.xlane.xlu0 %730
        %v732 = vsel %vm474, %v666, 0.0
        %733 = vadd.xlane.f32.xlu0 %v732
        %v734 = vpop.xlane.xlu0 %733
        %v735 = vsel %vm474, %v667, 0.0
        %736 = vadd.xlane.f32.xlu0 %v735
        %v737 = vpop.xlane.xlu0 %736
        %v738 = vsel %vm474, %v668, 0.0
        %739 = vadd.xlane.f32.xlu0 %v738
        %v740 = vpop.xlane.xlu0 %739
        %v741 = vsel %vm474, %v669, 0.0
        %742 = vadd.xlane.f32.xlu0 %v741
        %v743 = vpop.xlane.xlu0 %742
        %v744 = vsel %vm474, %v670, 0.0
        %745 = vadd.xlane.f32.xlu0 %v744
        %v746 = vpop.xlane.xlu0 %745
        %v747 = vsel %vm474, %v671, 0.0
        %748 = vadd.xlane.f32.xlu0 %v747
        %v749 = vpop.xlane.xlu0 %748
        %v750 = vsel %vm474, %v672, 0.0
        %751 = vadd.xlane.f32.xlu0 %v750
        %v752 = vpop.xlane.xlu0 %751
        %v753 = vsel %vm474, %v673, 0.0
        %754 = vadd.xlane.f32.xlu0 %v753
        %v755 = vpop.xlane.xlu0 %754
        %v756 = vsel %vm474, %v674, 0.0
        %757 = vadd.xlane.f32.xlu0 %v756
        %v758 = vpop.xlane.xlu0 %757
        %v759 = vsel %vm474, %v675, 0.0
        %760 = vadd.xlane.f32.xlu0 %v759
        %v761 = vpop.xlane.xlu0 %760
        %v762 = vsel %vm474, %v676, 0.0
        %763 = vadd.xlane.f32.xlu0 %v762
        %v764 = vpop.xlane.xlu0 %763
        %v765 = vsel %vm474, %v677, 0.0
        %766 = vadd.xlane.f32.xlu0 %v765
        %v767 = vpop.xlane.xlu0 %766
        %v768 = vsel %vm474, %v678, 0.0
        %769 = vadd.xlane.f32.xlu0 %v768
        %v770 = vpop.xlane.xlu0 %769
        %v771 = vsel %vm474, %v679, 0.0
        %772 = vadd.xlane.f32.xlu0 %v771
        %v773 = vpop.xlane.xlu0 %772
        %v774 = vsel %vm474, %v680, 0.0
        %775 = vadd.xlane.f32.xlu0 %v774
        %v776 = vpop.xlane.xlu0 %775
        %v777 = vld [vmem:[%s464] sm:$0x1]
        %vm778 = vcmp.gt.f32.partialorder %v777, 0.0
        %v779 = vsel %vm778, 1, 0
        %v780 = vperm.slane %v779, 0
        %vm781 = vcmp.eq.s32.totalorder %v780, 1
        %v814 = vlaneseq
        %v815 = vand.u32 %v814, 127
        %v816 = vperm.slane %v683, %v815
        %v817 = vadd.s32 %v815, 4294967288
        %v818 = vperm.slane %v686, %v817
        %vm819 = vcmask 130112
        %v820 = vsel %vm819, %v818, %v816
        %v821 = vperm.slane %v689, %v815
        %v822 = vperm.slane %v692, %v817
        %v823 = vsel %vm819, %v822, %v821
        %v824 = vperm.slane %v695, %v815
        %v825 = vperm.slane %v698, %v817
        %v826 = vsel %vm819, %v825, %v824
        %v827 = vperm.slane %v701, %v815
        %v828 = vperm.slane %v704, %v817
        %v829 = vsel %vm819, %v828, %v827
        %v830 = vperm.slane %v707, %v815
        %v831 = vperm.slane %v710, %v817
        %v832 = vsel %vm819, %v831, %v830
        %v833 = vperm.slane %v713, %v815
        %v834 = vperm.slane %v716, %v817
        %v835 = vsel %vm819, %v834, %v833
        %v836 = vperm.slane %v719, %v815
        %v837 = vperm.slane %v722, %v817
        %v838 = vsel %vm819, %v837, %v836
        %v839 = vperm.slane %v725, %v815
        %v840 = vperm.slane %v728, %v817
        %v841 = vsel %vm819, %v840, %v839
        %v842 = vperm.slane %v731, %v815
        %v843 = vperm.slane %v734, %v817
        %v844 = vsel %vm819, %v843, %v842
        %v845 = vperm.slane %v737, %v815
        %v846 = vperm.slane %v740, %v817
        %v847 = vsel %vm819, %v846, %v845
        %v848 = vperm.slane %v743, %v815
        %v849 = vperm.slane %v746, %v817
        %v850 = vsel %vm819, %v849, %v848
        %v851 = vperm.slane %v749, %v815
        %v852 = vperm.slane %v752, %v817
        %v853 = vsel %vm819, %v852, %v851
        %v854 = vperm.slane %v755, %v815
        %v855 = vperm.slane %v758, %v817
        %v856 = vsel %vm819, %v855, %v854
        %v857 = vperm.slane %v761, %v815
        %v858 = vperm.slane %v764, %v817
        %v859 = vsel %vm819, %v858, %v857
        %v860 = vperm.slane %v767, %v815
        %v861 = vperm.slane %v770, %v817
        %v862 = vsel %vm819, %v861, %v860
        %v863 = vperm.slane %v773, %v815
        %v864 = vperm.slane %v776, %v817
        %v865 = vsel %vm819, %v864, %v863
        %vm866 = vcmask 1041409
        %v867 = vsel %vm866, %v823, %v820
        %vm868 = vcmask 1042434
        %v869 = vsel %vm868, %v826, %v867
        %vm870 = vcmask 1043459
        %v871 = vsel %vm870, %v829, %v869
        %vm872 = vcmask 1044484
        %v873 = vsel %vm872, %v832, %v871
        %vm874 = vcmask 1045509
        %v875 = vsel %vm874, %v835, %v873
        %vm876 = vcmask 1046534
        %v877 = vsel %vm876, %v838, %v875
        %vm878 = vcmask 1047559
        %v879 = vsel %vm878, %v841, %v877
        %v880 = vsel %vm866, %v847, %v844
        %v881 = vsel %vm868, %v850, %v880
        %v882 = vsel %vm870, %v853, %v881
        %v883 = vsel %vm872, %v856, %v882
        %v884 = vsel %vm874, %v859, %v883
        %v885 = vsel %vm876, %v862, %v884
        %v886 = vsel %vm878, %v865, %v885
        %v889 = vsel %vm781, -1e+30, %v879
        %v890 = vsel %vm781, -1e+30, %v886
        %vm891 = vcmask 130048
        %v892 = vsel %vm891, %v889, -inf
        %893 = vmax.xlane.f32.xlu0 %v892
        %v894 = vpop.xlane.xlu0 %893
        %v895 = vsel %vm891, %v890, -inf
        %896 = vmax.xlane.f32.xlu0 %v895
        %v897 = vpop.xlane.xlu0 %896
        %v898 = vsub.f32 %v889, %v894
        %v899 = vsub.f32 %v890, %v897
        %v900 = vmul.f32 %v898, 1.442695
        %v901 = vpow.pop %v900
        %v902 = vmul.f32 %v899, 1.442695
        %v903 = vpow.pop %v902
        %v904 = vsel %vm891, %v901, 0.0
        %905 = vadd.xlane.f32.xlu0 %v904
        %v906 = vpop.xlane.xlu0 %905
        %v907 = vsel %vm891, %v903, 0.0
        %908 = vadd.xlane.f32.xlu0 %v907
        %v909 = vpop.xlane.xlu0 %908
        %v910 = vrcp.pop %v906
        %v911 = vrcp.pop %v909
        %v912 = vmul.f32 %v901, %v910
        %v913 = vmul.f32 %v903, %v911
        %v915 = vsel %vm891, %v912, 0
        %v918 = vsel %vm891, %v913, 0
        %920 = vmatpush.msra.mxu0 0.0
        %921 = vmatpush.msra.mxu0 0.0
        %922 = vmatpush.msra.mxu0 0.0
        %923 = vmatpush.msra.mxu0 0.0
        %924 = vmatpush.msra.mxu0 0.0
        %925 = vmatpush.msra.mxu0 0.0
        %926 = vmatpush.msra.mxu0 0.0
        %927 = vmatpush.msra.mxu0 0.0
        %928 = vmatpush.msra.mxu0 0.0
        %929 = vmatpush.msra.mxu0 0.0
        %930 = vmatpush.msra.mxu0 0.0
        %931 = vmatpush.msra.mxu0 0.0
        %932 = vmatpush.msra.mxu0 0.0
        %933 = vmatpush.msra.mxu0 0.0
        %934 = vmatpush.msra.mxu0 %v469
        %935 = vmatpush.msra.mxu0 %v468
        %936 = vmatmul.f32.gmra.mxu0 %v915
        %v937 = vpop.f32.mrf.mxu0
        %v938 = vadd.f32 0.0, %v937
        %939 = vmatmul.f32.gmra.mxu0 %v918
        %v940 = vpop.f32.mrf.mxu0
        %v941 = vadd.f32 0.0, %v940
        %942 = vdwg.mxu0
        %v943 = vld [vmem:[#allocation10] sm:$0xff]
        %v944 = vld [vmem:[#allocation10 + $0x8] sm:$0xff]
        %v945 = vld [vmem:[#allocation10 + $0x10] sm:$0xff]
        %v946 = vld [vmem:[#allocation10 + $0x18] sm:$0xff]
        %v947 = vld [vmem:[#allocation10 + $0x20] sm:$0xff]
        %v948 = vld [vmem:[#allocation10 + $0x28] sm:$0xff]
        %v949 = vld [vmem:[#allocation10 + $0x30] sm:$0xff]
        %v950 = vld [vmem:[#allocation10 + $0x38] sm:$0xff]
        %v951 = vld [vmem:[#allocation11] sm:$0xff]
        %v952 = vld [vmem:[#allocation11 + $0x8] sm:$0xff]
        %v953 = vld [vmem:[#allocation11 + $0x10] sm:$0xff]
        %v954 = vld [vmem:[#allocation11 + $0x18] sm:$0xff]
        %v955 = vld [vmem:[#allocation11 + $0x20] sm:$0xff]
        %v956 = vld [vmem:[#allocation11 + $0x28] sm:$0xff]
        %v957 = vld [vmem:[#allocation11 + $0x30] sm:$0xff]
        %v958 = vld [vmem:[#allocation11 + $0x38] sm:$0xff]
        %959 = vmatpush.msra.mxu0 0.0
        %960 = vmatpush.msra.mxu0 0.0
        %961 = vmatpush.msra.mxu0 0.0
        %962 = vmatpush.msra.mxu0 0.0
        %963 = vmatpush.msra.mxu0 0.0
        %964 = vmatpush.msra.mxu0 0.0
        %965 = vmatpush.msra.mxu0 0.0
        %966 = vmatpush.msra.mxu0 0.0
        %967 = vmatpush.msra.mxu0 0.0
        %968 = vmatpush.msra.mxu0 0.0
        %969 = vmatpush.msra.mxu0 0.0
        %970 = vmatpush.msra.mxu0 0.0
        %971 = vmatpush.msra.mxu0 %v957
        %972 = vmatpush.msra.mxu0 %v955
        %973 = vmatpush.msra.mxu0 %v953
        %974 = vmatpush.msra.mxu0 %v951
        %975 = vmatmul.f32.gmra.mxu0 %v476
        %v976 = vpop.f32.mrf.mxu0
        %v977 = vadd.f32 0.0, %v976
        %978 = vmatmul.f32.gmra.mxu0 %v479
        %v979 = vpop.f32.mrf.mxu0
        %v980 = vadd.f32 0.0, %v979
        %981 = vdwg.mxu0
        %982 = vmatpush.msra.mxu0 0.0
        %983 = vmatpush.msra.mxu0 0.0
        %984 = vmatpush.msra.mxu0 0.0
        %985 = vmatpush.msra.mxu0 0.0
        %986 = vmatpush.msra.mxu0 0.0
        %987 = vmatpush.msra.mxu0 0.0
        %988 = vmatpush.msra.mxu0 0.0
        %989 = vmatpush.msra.mxu0 0.0
        %990 = vmatpush.msra.mxu0 0.0
        %991 = vmatpush.msra.mxu0 0.0
        %992 = vmatpush.msra.mxu0 0.0
        %993 = vmatpush.msra.mxu0 0.0
        %994 = vmatpush.msra.mxu0 %v958
        %995 = vmatpush.msra.mxu0 %v956
        %996 = vmatpush.msra.mxu0 %v954
        %997 = vmatpush.msra.mxu0 %v952
        %998 = vmatmul.f32.gmra.mxu0 %v476
        %v999 = vpop.f32.mrf.mxu0
        %v1000 = vadd.f32 0.0, %v999
        %1001 = vmatmul.f32.gmra.mxu0 %v479
        %v1002 = vpop.f32.mrf.mxu0
        %v1003 = vadd.f32 0.0, %v1002
        %1004 = vdwg.mxu0
        %v1006 = vsel %vm474, %v938, 0
        %v1009 = vsel %vm474, %v941, 0
        %1011 = vmatpush.msra.mxu0 0.0
        %1012 = vmatpush.msra.mxu0 0.0
        %1013 = vmatpush.msra.mxu0 0.0
        %1014 = vmatpush.msra.mxu0 0.0
        %1015 = vmatpush.msra.mxu0 0.0
        %1016 = vmatpush.msra.mxu0 0.0
        %1017 = vmatpush.msra.mxu0 0.0
        %1018 = vmatpush.msra.mxu0 0.0
        %1019 = vmatpush.msra.mxu0 0.0
        %1020 = vmatpush.msra.mxu0 0.0
        %1021 = vmatpush.msra.mxu0 0.0
        %1022 = vmatpush.msra.mxu0 0.0
        %1023 = vmatpush.msra.mxu0 %v949
        %1024 = vmatpush.msra.mxu0 %v947
        %1025 = vmatpush.msra.mxu0 %v945
        %1026 = vmatpush.msra.mxu0 %v943
        %1027 = vmatmul.f32.gmra.mxu0 %v1006
        %v1028 = vpop.f32.mrf.mxu0
        %v1029 = vadd.f32 %v977, %v1028
        %1030 = vmatmul.f32.gmra.mxu0 %v1009
        %v1031 = vpop.f32.mrf.mxu0
        %v1032 = vadd.f32 %v980, %v1031
        %1033 = vdwg.mxu0
        %1034 = vmatpush.msra.mxu0 0.0
        %1035 = vmatpush.msra.mxu0 0.0
        %1036 = vmatpush.msra.mxu0 0.0
        %1037 = vmatpush.msra.mxu0 0.0
        %1038 = vmatpush.msra.mxu0 0.0
        %1039 = vmatpush.msra.mxu0 0.0
        %1040 = vmatpush.msra.mxu0 0.0
        %1041 = vmatpush.msra.mxu0 0.0
        %1042 = vmatpush.msra.mxu0 0.0
        %1043 = vmatpush.msra.mxu0 0.0
        %1044 = vmatpush.msra.mxu0 0.0
        %1045 = vmatpush.msra.mxu0 0.0
        %1046 = vmatpush.msra.mxu0 %v950
        %1047 = vmatpush.msra.mxu0 %v948
        %1048 = vmatpush.msra.mxu0 %v946
        %1049 = vmatpush.msra.mxu0 %v944
        %1050 = vmatmul.f32.gmra.mxu0 %v1006
        %v1051 = vpop.f32.mrf.mxu0
        %v1052 = vadd.f32 %v1000, %v1051
        %1053 = vmatmul.f32.gmra.mxu0 %v1009
        %v1054 = vpop.f32.mrf.mxu0
        %v1055 = vadd.f32 %v1003, %v1054
        %1056 = vdwg.mxu0
        %v1057 = vld [vmem:[%s7] sm:$0x3]
        %v1059 = vperm.slane %v1057, 0
        %v1060 = vperm.slane %v1057, 1
        %v1063 = vadd.f32 %v1029, %v1059
        %v1064 = vadd.f32 %v1052, %v1060
        %v1065 = vadd.f32 %v1032, %v1059
        %v1066 = vadd.f32 %v1055, %v1060
        %1067 = vst [vmem:[%s460] sm:$0xff] %v1063
        %vm1068 = vcmask 523264
        %1069 = vst.msk [vmem:[%s460 + $0x8] sm:$0xff] %vm1068, %v1064
        %1070 = vst [vmem:[%s460 + $0x10] sm:$0xff] %v1065
        %1071 = vst.msk [vmem:[%s460 + $0x18] sm:$0xff] %vm1068, %v1066
        %s1072 = sand.u32 %s237, 1
        %s1073 = scalar_lea.sflag [#allocation4], %s1072
        %s1074 = sand.u32 %s237, 1
        %s1075 = smul.addr %s1074, 32
        %s1076 = scalar_lea.vmem [#allocation13], %s1075
        // Predicated region
        $region77: #{tpu_custom_call.1} parent=51 // pred_check
          %p1077 = pneg %p247
        $region78: #{tpu_custom_call.1} parent=51 // pred_check_branch
          %1079 = sbr.rel (%p1077) target = $region80
        $region79: #{tpu_custom_call.1} parent=51 // pred_region
          %s1080 = smul.u32 2, %s35
          %1082 = vsyncadd %s1073, 0
          %s1083 = smul.addr %s1080, 2
          %s1084 = smul.addr %s34, 4
          %s1085 = sadd.s32 %s1083, %s1084
          %s1086 = smul.addr %s1085, 8
          %s1087 = scalar_lea.hbm %s8, %s1086
          %s1088 = sshll.u32 %s1076, 4
          %s1089 = int_to_ptr.vmem [resolvable:$true] %s1088
          %s1090 = sshll.u32 %s1087, 4
          %s1091 = int_to_ptr.hbm [resolvable:$true] %s1090
          %1096 = dma.vmem_to_hbm [thread:$0]  %s1089, 512, %s1091, %s1073, 256, 256, 16
        $region80: #{tpu_custom_call.1} parent=51 // pred_fallthru
          _
      $region52: #{tpu_custom_call.1} parent=5 // pred_fallthru
        _
      %p1097 = scmp.le.s32.totalorder 2, %s25
      // Predicated region
      $region81: #{tpu_custom_call.1} parent=5 // pred_check
        %p1098 = pneg %p1097
      $region82: #{tpu_custom_call.1} parent=5 // pred_check_branch
        %1100 = sbr.rel (%p1098) target = $region84
      $region83: #{tpu_custom_call.1} parent=5 // pred_region
        %s1101 = ssub.s32 %s25, 2
        // Predicated region
        $region85: #{tpu_custom_call.1} parent=83 // pred_check
          %p1102 = pneg %p253
        $region86: #{tpu_custom_call.1} parent=83 // pred_check_branch
          %1104 = sbr.rel (%p1102) target = $region88
        $region87: #{tpu_custom_call.1} parent=83 // pred_region
          %s1105 = sand.u32 %s238, 1
          %s1106 = scalar_lea.sflag [#allocation4], %s1105
          %s1107 = sand.u32 %s238, 1
          %s1108 = smul.addr %s1107, 32
          %s1109 = scalar_lea.vmem [#allocation13], %s1108
          %1111 = dma.done %s1106, 512
        $region88: #{tpu_custom_call.1} parent=83 // pred_fallthru
          _
      $region84: #{tpu_custom_call.1} parent=5 // pred_fallthru
        _
    $region6: #{tpu_custom_call.1} parent=1 // loop_footer
      %s29 = sadd.s32 1, %s25
    $region7: #{tpu_custom_call.1} parent=1 // loop_footer_branch
      %24 = sbr.rel target = $region3
    $region8: #{tpu_custom_call.1} parent=1 // loop_exit
      _
    %1112 = vsyncpa [#allocation3], 1
    %s1113 = scalar_lea.sflag [#allocation3], 1
    %1114 = vsyncpa %s1113, 1
    %1115 = vsyncpa [#allocation6], 1
    %s1116 = scalar_lea.sflag [#allocation6], 1
    %1117 = vsyncpa %s1116, 1
    %1118 = vsyncpa [#allocation9], 1
    %1119 = vsyncpa [#allocation12], 1
    %1120 = vsyncpa [#allocation4], 1
    %s1121 = scalar_lea.sflag [#allocation4], 1
    %1122 = vsyncpa %s1121, 1

</llo_original>
